<compile_context>
chip_gen: v7x
topology: tpu7x:2x2x1
jax: 0.10.0
libtpu: 0.0.40
codegen_flags: <defaults>
</compile_context>

<pallas_src>
import jax
import jax.numpy as jnp
from jax import lax
from jax.experimental import pallas as pl
from jax.experimental.pallas import tpu as pltpu

C_PAD = 128  # lane-dense classifier width


def _round_up(x, m):
    return ((x + m - 1) // m) * m


def bow_kernel(idx_ref, emb_ref, w_ref, b_ref, out_ref, acc_ref):
    # idx_ref : (S, TB)     int32  token ids, batch on lanes
    # emb_ref : (TV, E)     bf16   vocab tile of the (padded) embedding table
    # w_ref   : (E, C_PAD)  bf16   Linear weight^T pre-scaled by 1/S, zero-padded lanes
    # b_ref   : (1, C_PAD)  f32    bias, zero-padded
    # out_ref : (TB, C_PAD) f32    padded scores
    # acc_ref : (TB, E)     f32    running embedding-sum accumulator over vocab tiles
    kv = pl.program_id(1)

    @pl.when(kv == 0)
    def _init():
        acc_ref[...] = jnp.zeros_like(acc_ref)

    S, TB = idx_ref.shape
    TV, _ = emb_ref.shape
    v_base = kv * TV

    # counts[v, b] = #{s : idx[s, b] == v_base + v}, built as an S-loop of 2-D (TV, TB)
    # compares: bounded intermediates (no S-scaled 3-D one-hot) and the vocab offset is
    # hoisted onto the tiny (1, TB) idx row instead of a 3-D iota.
    iota_v = lax.broadcasted_iota(jnp.int32, (TV, TB), 0)

    def add_step(s, counts):
        row = idx_ref[pl.ds(s, 1), :] - v_base            # (1, TB), broadcast on sublanes
        return counts + (iota_v == row).astype(jnp.float32)

    counts0 = jnp.zeros((TV, TB), jnp.float32)
    if S <= 32:
        # Fully static unroll for short sequences (best LLO scheduler visibility).
        counts = counts0
        for s in range(S):
            counts = add_step(s, counts)
    else:
        counts = lax.fori_loop(0, S, add_step, counts0, unroll=8)

    # Partial embedding sum for this vocab tile: acc += counts^T @ emb (f32 accumulate).
    # counts <= S are exact in bf16 only for S <= 256; otherwise keep f32 MXU operands.
    if S <= 256:
        lhs, rhs = counts.astype(jnp.bfloat16), emb_ref[...]
    else:
        lhs, rhs = counts, emb_ref[...].astype(jnp.float32)
    acc_ref[...] += lax.dot_general(
        lhs, rhs, dimension_numbers=(((0,), (0,)), ((), ())),
        preferred_element_type=jnp.float32)

    @pl.when(kv == pl.num_programs(1) - 1)
    def _finalize():
        # 1/S (sequence mean) is pre-folded into w_ref in the wrapper.
        # TODO(synk): dropout implemented as identity (eval-mode semantics);
        # training-mode Bernoulli masking/scaling omitted.
        out_ref[...] = (jnp.dot(acc_ref[...].astype(jnp.bfloat16), w_ref[...],
                                preferred_element_type=jnp.float32)
                        + b_ref[...])


def bow_forward(docs, emb_table, w, b, *, tile_v=None, tile_b=None):
    """docs: (seq, batch) int; emb_table: (V, E); w: (C, E); b: (C,) -> (batch, C) f32."""
    S, B = docs.shape
    V, E = emb_table.shape
    C = w.shape[0]
    assert C <= C_PAD, "classifier wider than one lane tile not implemented"

    # Per-generation VMEM budget: v7x has 64 MiB per TensorCore, v5e/v6e have 128 MiB
    # (but only a 16/32 MiB scoped default, so we raise it explicitly).
    try:
        vmem_cap = int(getattr(pltpu.get_tpu_info(), "vmem_capacity_bytes", 64 << 20))
    except Exception:  # conservative fallback
        vmem_cap = 64 << 20
    vmem_limit = min(64 << 20, max(32 << 20, vmem_cap // 2))

    # Batch tiling: full batch, or 128-lane tiles for large batches ("parallel" axis;
    # on v7x both TensorCores are used once B >= 2 * tile_b).
    if tile_b is None:
        tile_b = 128 if (B > 128 and B % 128 == 0) else B
    assert B % tile_b == 0 and (tile_b == B or tile_b % 128 == 0)

    # Vocab tiling: always stream the table in tiles; pad V up so any vocab size tiles
    # (padded rows can never match since token ids < V).  Bigger tiles on 128 MiB parts.
    if tile_v is None:
        tile_v = 2048 if vmem_cap >= (96 << 20) else 512
    tile_v = _round_up(min(tile_v, _round_up(V, 8)), 8)
    # Keep double-buffered emb tiles + the counts buffer well under the VMEM budget.
    while tile_v > 8 and (tile_v * E * 2 * 2 + tile_v * tile_b * 4) > vmem_limit // 4:
        tile_v = _round_up(tile_v // 2, 8)
    V_pad = _round_up(V, tile_v)

    emb = emb_table.astype(jnp.bfloat16)
    if V_pad != V:
        emb = jnp.zeros((V_pad, E), jnp.bfloat16).at[:V, :].set(emb)

    # Lane-dense classifier with the 1/S sequence mean folded into W^T.
    w_t = jnp.zeros((E, C_PAD), jnp.bfloat16).at[:, :C].set(
        (w.T.astype(jnp.float32) / S).astype(jnp.bfloat16))
    bias = jnp.zeros((1, C_PAD), jnp.float32).at[0, :C].set(b.astype(jnp.float32))
    idx = docs.astype(jnp.int32)                          # (S, B), batch on lanes

    grid = (B // tile_b, V_pad // tile_v)                 # (parallel batch, reduce vocab)

    # TODO(synk): for very large vocabularies a DMA row-gather path (emb_table kept in
    # HBM via memory_space=pl.ANY + scalar-prefetched ids) would replace the O(S*B*V)
    # compares with O(S*B*E) DMA; the counts-matmul path is right at this vocab scale.

    out = pl.pallas_call(
        bow_kernel,
        out_shape=jax.ShapeDtypeStruct((B, C_PAD), jnp.float32),
        grid_spec=pltpu.PrefetchScalarGridSpec(
            num_scalar_prefetch=0,
            grid=grid,
            in_specs=[
                pl.BlockSpec((S, tile_b), lambda i, k: (0, i)),     # token ids
                pl.BlockSpec((tile_v, E), lambda i, k: (k, 0)),     # vocab-tiled table
                pl.BlockSpec((E, C_PAD), lambda i, k: (0, 0)),      # classifier W^T / S
                pl.BlockSpec((1, C_PAD), lambda i, k: (0, 0)),      # bias
            ],
            out_specs=pl.BlockSpec((tile_b, C_PAD), lambda i, k: (i, 0)),
            scratch_shapes=[pltpu.VMEM((tile_b, E), jnp.float32)],  # embedding-sum acc
        ),
        compiler_params=pltpu.CompilerParams(
            dimension_semantics=("parallel", "arbitrary"),
            vmem_limit_bytes=int(vmem_limit),
        ),
    )(idx, emb, w_t, bias)

    return out[:, :C]


if __name__ == "__main__":
    # Small shapes consistent with the module's forward (docs are (seq, batch) ints).
    SEQ, BATCH = 8, 8
    VOCAB, EMB_DIM, N_CLASSES = 256, 128, 8

    key = jax.random.PRNGKey(0)
    k_emb, k_w, k_b, k_docs = jax.random.split(key, 4)

    # Deterministic parameter init (mimicking nn.Embedding / nn.Linear shapes).
    emb_table = jax.random.normal(k_emb, (VOCAB, EMB_DIM), dtype=jnp.float32)
    emb_table = emb_table.at[0].set(0.0)                 # padding_idx=0 -> zero row
    w = jax.random.normal(k_w, (N_CLASSES, EMB_DIM), dtype=jnp.float32) * 0.1
    b = jax.random.normal(k_b, (N_CLASSES,), dtype=jnp.float32) * 0.1

    docs = jax.random.randint(k_docs, (SEQ, BATCH), 0, VOCAB, dtype=jnp.int32)

    # tile_v=128 -> 2 vocab tiles, exercising the accumulator/reduction grid axis.
    scores = bow_forward(docs, emb_table, w, b, tile_v=128)
    scores = jax.block_until_ready(scores)

    # Pure-JAX f32 reference (eval-mode dropout = identity).
    embedded = emb_table[docs]                           # (S, B, E)
    cbow = embedded.mean(axis=0)                         # (B, E)
    ref = cbow @ w.T + b                                 # (B, C)

    assert scores.shape == (BATCH, N_CLASSES)
    # Tolerance loosened vs the pure-f32 reference because the kernel feeds the MXU
    # bf16 operands (f32 accumulation).
    assert jnp.allclose(scores, ref, atol=2e-2, rtol=2e-2), (
        f"max abs err {jnp.max(jnp.abs(scores - ref))}")
    print("KERNEL_OK")
</pallas_src>

<mosaic_0001>
module attributes {stable_mosaic.version = 11 : i64} {
  func.func @bow_kernel(%arg0: i32, %arg1: i32, %arg2: memref<8x8xi32, #tpu.memory_space<vmem>>, %arg3: memref<128x128xbf16, #tpu.memory_space<vmem>>, %arg4: memref<128x128xbf16, #tpu.memory_space<vmem>>, %arg5: memref<1x128xf32, #tpu.memory_space<vmem>>, %arg6: memref<8x128xf32, #tpu.memory_space<vmem>>, %arg7: memref<8x128xf32, #tpu.memory_space<vmem>>) attributes {dimension_semantics = [#tpu.dimension_semantics<parallel>, #tpu.dimension_semantics<arbitrary>], iteration_bounds = array<i64: 1, 2>, scalar_prefetch = 0 : i64, scratch_operands = 1 : i64, tpu.core_type = #tpu.core_type<tc>, window_params = [{transform_indices = @transform_0, window_bounds = array<i64: 8, 8>}, {transform_indices = @transform_1, window_bounds = array<i64: 128, 128>}, {pipeline_mode = #tpu.pipeline_mode<synchronous>, transform_indices = @transform_2, window_bounds = array<i64: 128, 128>}, {pipeline_mode = #tpu.pipeline_mode<synchronous>, transform_indices = @transform_3, window_bounds = array<i64: 1, 128>}, {transform_indices = @transform_4, window_bounds = array<i64: 8, 128>}]} {
    %c0_i32 = arith.constant 0 : i32
    %0 = arith.cmpi eq, %arg1, %c0_i32 : i32
    %1 = arith.extui %0 : i1 to i32
    %c0_i32_0 = arith.constant 0 : i32
    %2 = arith.cmpi ne, %1, %c0_i32_0 : i32
    scf.if %2 {
      %cst_17 = arith.constant 0.000000e+00 : f32
      %79 = vector.broadcast %cst_17 : f32 to vector<8x128xf32>
      %c0_18 = arith.constant 0 : index
      %c0_19 = arith.constant 0 : index
      %80 = vector.load %arg7[%c0_18, %c0_19] : memref<8x128xf32, #tpu.memory_space<vmem>>, vector<8x128xf32>
      tpu.vector_store %arg7[%c0_18, %c0_19], %79 {strides = array<i32>} : memref<8x128xf32, #tpu.memory_space<vmem>>, vector<8x128xf32>,
    } else {
    }
    %c128_i32 = arith.constant 128 : i32
    %3 = arith.muli %arg1, %c128_i32 : i32
    %4 = tpu.iota {dimensions = array<i32: 0>} : vector<128x8xi32>
    %cst = arith.constant 0.000000e+00 : f32
    %5 = vector.broadcast %cst : f32 to vector<128x8xf32>
    %c0 = arith.constant 0 : index
    %c0_1 = arith.constant 0 : index
    %6 = vector.load %arg2[%c0, %c0_1] : memref<8x8xi32, #tpu.memory_space<vmem>>, vector<1x8xi32>
    %7 = vector.broadcast %3 : i32 to vector<1x8xi32>
    %8 = arith.subi %6, %7 : vector<1x8xi32>
    %9 = vector.broadcast %8 : vector<1x8xi32> to vector<128x8xi32>
    %10 = arith.cmpi eq, %4, %9 : vector<128x8xi32>
    %11 = arith.extui %10 : vector<128x8xi1> to vector<128x8xi32>
    %12 = arith.sitofp %11 : vector<128x8xi32> to vector<128x8xf32>
    %13 = arith.addf %5, %12 : vector<128x8xf32>
    %c1 = arith.constant 1 : index
    %c0_2 = arith.constant 0 : index
    %14 = vector.load %arg2[%c1, %c0_2] : memref<8x8xi32, #tpu.memory_space<vmem>>, vector<1x8xi32>
    %15 = vector.broadcast %3 : i32 to vector<1x8xi32>
    %16 = arith.subi %14, %15 : vector<1x8xi32>
    %17 = vector.broadcast %16 : vector<1x8xi32> to vector<128x8xi32>
    %18 = arith.cmpi eq, %4, %17 : vector<128x8xi32>
    %19 = arith.extui %18 : vector<128x8xi1> to vector<128x8xi32>
    %20 = arith.sitofp %19 : vector<128x8xi32> to vector<128x8xf32>
    %21 = arith.addf %13, %20 : vector<128x8xf32>
    %c2 = arith.constant 2 : index
    %c0_3 = arith.constant 0 : index
    %22 = vector.load %arg2[%c2, %c0_3] : memref<8x8xi32, #tpu.memory_space<vmem>>, vector<1x8xi32>
    %23 = vector.broadcast %3 : i32 to vector<1x8xi32>
    %24 = arith.subi %22, %23 : vector<1x8xi32>
    %25 = vector.broadcast %24 : vector<1x8xi32> to vector<128x8xi32>
    %26 = arith.cmpi eq, %4, %25 : vector<128x8xi32>
    %27 = arith.extui %26 : vector<128x8xi1> to vector<128x8xi32>
    %28 = arith.sitofp %27 : vector<128x8xi32> to vector<128x8xf32>
    %29 = arith.addf %21, %28 : vector<128x8xf32>
    %c3 = arith.constant 3 : index
    %c0_4 = arith.constant 0 : index
    %30 = vector.load %arg2[%c3, %c0_4] : memref<8x8xi32, #tpu.memory_space<vmem>>, vector<1x8xi32>
    %31 = vector.broadcast %3 : i32 to vector<1x8xi32>
    %32 = arith.subi %30, %31 : vector<1x8xi32>
    %33 = vector.broadcast %32 : vector<1x8xi32> to vector<128x8xi32>
    %34 = arith.cmpi eq, %4, %33 : vector<128x8xi32>
    %35 = arith.extui %34 : vector<128x8xi1> to vector<128x8xi32>
    %36 = arith.sitofp %35 : vector<128x8xi32> to vector<128x8xf32>
    %37 = arith.addf %29, %36 : vector<128x8xf32>
    %c4 = arith.constant 4 : index
    %c0_5 = arith.constant 0 : index
    %38 = vector.load %arg2[%c4, %c0_5] : memref<8x8xi32, #tpu.memory_space<vmem>>, vector<1x8xi32>
    %39 = vector.broadcast %3 : i32 to vector<1x8xi32>
    %40 = arith.subi %38, %39 : vector<1x8xi32>
    %41 = vector.broadcast %40 : vector<1x8xi32> to vector<128x8xi32>
    %42 = arith.cmpi eq, %4, %41 : vector<128x8xi32>
    %43 = arith.extui %42 : vector<128x8xi1> to vector<128x8xi32>
    %44 = arith.sitofp %43 : vector<128x8xi32> to vector<128x8xf32>
    %45 = arith.addf %37, %44 : vector<128x8xf32>
    %c5 = arith.constant 5 : index
    %c0_6 = arith.constant 0 : index
    %46 = vector.load %arg2[%c5, %c0_6] : memref<8x8xi32, #tpu.memory_space<vmem>>, vector<1x8xi32>
    %47 = vector.broadcast %3 : i32 to vector<1x8xi32>
    %48 = arith.subi %46, %47 : vector<1x8xi32>
    %49 = vector.broadcast %48 : vector<1x8xi32> to vector<128x8xi32>
    %50 = arith.cmpi eq, %4, %49 : vector<128x8xi32>
    %51 = arith.extui %50 : vector<128x8xi1> to vector<128x8xi32>
    %52 = arith.sitofp %51 : vector<128x8xi32> to vector<128x8xf32>
    %53 = arith.addf %45, %52 : vector<128x8xf32>
    %c6 = arith.constant 6 : index
    %c0_7 = arith.constant 0 : index
    %54 = vector.load %arg2[%c6, %c0_7] : memref<8x8xi32, #tpu.memory_space<vmem>>, vector<1x8xi32>
    %55 = vector.broadcast %3 : i32 to vector<1x8xi32>
    %56 = arith.subi %54, %55 : vector<1x8xi32>
    %57 = vector.broadcast %56 : vector<1x8xi32> to vector<128x8xi32>
    %58 = arith.cmpi eq, %4, %57 : vector<128x8xi32>
    %59 = arith.extui %58 : vector<128x8xi1> to vector<128x8xi32>
    %60 = arith.sitofp %59 : vector<128x8xi32> to vector<128x8xf32>
    %61 = arith.addf %53, %60 : vector<128x8xf32>
    %c7 = arith.constant 7 : index
    %c0_8 = arith.constant 0 : index
    %62 = vector.load %arg2[%c7, %c0_8] : memref<8x8xi32, #tpu.memory_space<vmem>>, vector<1x8xi32>
    %63 = vector.broadcast %3 : i32 to vector<1x8xi32>
    %64 = arith.subi %62, %63 : vector<1x8xi32>
    %65 = vector.broadcast %64 : vector<1x8xi32> to vector<128x8xi32>
    %66 = arith.cmpi eq, %4, %65 : vector<128x8xi32>
    %67 = arith.extui %66 : vector<128x8xi1> to vector<128x8xi32>
    %68 = arith.sitofp %67 : vector<128x8xi32> to vector<128x8xf32>
    %69 = arith.addf %61, %68 : vector<128x8xf32>
    %70 = arith.truncf %69 : vector<128x8xf32> to vector<128x8xbf16>
    %c0_9 = arith.constant 0 : index
    %c0_10 = arith.constant 0 : index
    %71 = vector.load %arg3[%c0_9, %c0_10] : memref<128x128xbf16, #tpu.memory_space<vmem>>, vector<128x128xbf16>
    %c0_11 = arith.constant 0 : index
    %c0_12 = arith.constant 0 : index
    %72 = vector.load %arg7[%c0_11, %c0_12] : memref<8x128xf32, #tpu.memory_space<vmem>>, vector<8x128xf32>
    %cst_13 = arith.constant dense<0.000000e+00> : vector<8x128xf32>
    %73 = tpu.matmul %70, %71, %cst_13 {dimension_numbers = #tpu.dot_dimension_numbers<[0], [0], [1], [1], [0, 1, 1, 1], [], []>} : vector<128x8xbf16>, vector<128x128xbf16>, vector<8x128xf32> -> vector<8x128xf32>
    %74 = arith.addf %72, %73 : vector<8x128xf32>
    %c0_14 = arith.constant 0 : index
    %c0_15 = arith.constant 0 : index
    %75 = vector.load %arg7[%c0_14, %c0_15] : memref<8x128xf32, #tpu.memory_space<vmem>>, vector<8x128xf32>
    tpu.vector_store %arg7[%c0_14, %c0_15], %74 {strides = array<i32>} : memref<8x128xf32, #tpu.memory_space<vmem>>, vector<8x128xf32>,
    %c1_i32 = arith.constant 1 : i32
    %76 = arith.cmpi eq, %arg1, %c1_i32 : i32
    %77 = arith.extui %76 : i1 to i32
    %c0_i32_16 = arith.constant 0 : i32
    %78 = arith.cmpi ne, %77, %c0_i32_16 : i32
    scf.if %78 {
      %c0_17 = arith.constant 0 : index
      %c0_18 = arith.constant 0 : index
      %79 = vector.load %arg7[%c0_17, %c0_18] : memref<8x128xf32, #tpu.memory_space<vmem>>, vector<8x128xf32>
      %80 = arith.truncf %79 : vector<8x128xf32> to vector<8x128xbf16>
      %c0_19 = arith.constant 0 : index
      %c0_20 = arith.constant 0 : index
      %81 = vector.load %arg4[%c0_19, %c0_20] : memref<128x128xbf16, #tpu.memory_space<vmem>>, vector<128x128xbf16>
      %cst_21 = arith.constant dense<0.000000e+00> : vector<8x128xf32>
      %82 = tpu.matmul %80, %81, %cst_21 {dimension_numbers = #tpu.dot_dimension_numbers<[1], [0], [0], [1], [0, 0, 1, 1], [], []>} : vector<8x128xbf16>, vector<128x128xbf16>, vector<8x128xf32> -> vector<8x128xf32>
      %c0_22 = arith.constant 0 : index
      %c0_23 = arith.constant 0 : index
      %83 = vector.load %arg5[%c0_22, %c0_23] : memref<1x128xf32, #tpu.memory_space<vmem>>, vector<1x128xf32>
      %84 = vector.broadcast %83 : vector<1x128xf32> to vector<8x128xf32>
      %85 = arith.addf %82, %84 : vector<8x128xf32>
      %c0_24 = arith.constant 0 : index
      %c0_25 = arith.constant 0 : index
      %86 = vector.load %arg6[%c0_24, %c0_25] : memref<8x128xf32, #tpu.memory_space<vmem>>, vector<8x128xf32>
      tpu.vector_store %arg6[%c0_24, %c0_25], %85 {strides = array<i32>} : memref<8x128xf32, #tpu.memory_space<vmem>>, vector<8x128xf32>,
    } else {
    }
    return
  }
  func.func @transform_0(%arg0: i32, %arg1: i32) -> (i32, i32) {
    %c0_i32 = arith.constant 0 : i32
    %c0_i32_0 = arith.constant 0 : i32
    return %c0_i32, %arg0 : i32, i32
  }
  func.func @transform_1(%arg0: i32, %arg1: i32) -> (i32, i32) {
    %c0_i32 = arith.constant 0 : i32
    %c0_i32_0 = arith.constant 0 : i32
    return %arg1, %c0_i32 : i32, i32
  }
  func.func @transform_2(%arg0: i32, %arg1: i32) -> (i32, i32) {
    %c0_i32 = arith.constant 0 : i32
    %c0_i32_0 = arith.constant 0 : i32
    %c0_i32_1 = arith.constant 0 : i32
    return %c0_i32, %c0_i32_0 : i32, i32
  }
  func.func @transform_3(%arg0: i32, %arg1: i32) -> (i32, i32) {
    %c0_i32 = arith.constant 0 : i32
    %c0_i32_0 = arith.constant 0 : i32
    %c0_i32_1 = arith.constant 0 : i32
    return %c0_i32, %c0_i32_0 : i32, i32
  }
  func.func @transform_4(%arg0: i32, %arg1: i32) -> (i32, i32) {
    %c0_i32 = arith.constant 0 : i32
    %c0_i32_0 = arith.constant 0 : i32
    return %arg0, %c0_i32 : i32, i32
  }
}

</mosaic_0001>

<llo_original>
// kernel: tpu_custom_call.1
$region0: #{tpu_custom_call.1}
  #allocation0 [shape = 'u32[]', space=smem, size = 0x4, offset = 0x4, fixed_abs, tag = 'smem constant byte address 0x4 - core index']
  #allocation1 [shape = 'u32[144,128]{1,0:T(1,128)}', space=vmem, size = 0x12000, scoped, tag = 'internal scratch']
  #allocation2 [shape = 'f32[8,128]{1,0:T(8,128)}', space=vmem, size = 0x1000, scoped, tag = 'scratch operand']
  %s0 = inlined_call_operand.hbm [shape: s32[8,8], index: 0, kind: input, shape index: {}]
  %s1 = inlined_call_operand.hbm [shape: bf16[256,128], index: 1, kind: input, shape index: {}]
  %s2 = inlined_call_operand.hbm [shape: bf16[128,128], index: 2, kind: input, shape index: {}]
  %s3 = inlined_call_operand.vmem [shape: f32[1,128], index: 3, kind: input, shape index: {}]
  %s4 = inlined_call_operand.hbm [shape: f32[8,128], index: 4, kind: output, shape index: {}]
  %s5 = sld [smem:[#allocation0]]
  $region69: #{tpu_custom_call.1} parent=0
    _
  %s7 = ssub.s32 1, %s5
  %s8 = scalar_select 0, %s7, %s5
  $region1: #{tpu_custom_call.1} parent=0
    #allocation3 [shape = 'u8[4096]{0}', space=vmem, size = 0x1000, scoped, tag = 'input window, operand 0, single buffered']
    #allocation4 [shape = 's32[2]{0}', space=sflag, size = 0x8, scoped, tag = 'scoped memory for tpu_custom_call.1']
    #allocation5 [shape = 's32[2]{0}', space=sflag, size = 0x8, scoped, tag = 'scoped memory for tpu_custom_call.1']
    #allocation6 [shape = 'u8[65536]{0}', space=vmem, size = 0x10000, scoped, tag = 'input window, operand 1']
    #allocation7 [shape = 's32[2]{0}', space=sflag, size = 0x8, scoped, tag = 'scoped memory for tpu_custom_call.1']
    #allocation8 [shape = 'u8[32768]{0}', space=vmem, size = 0x8000, scoped, tag = 'input window, operand 2, single buffered']
    #allocation9 [shape = 'u8[4096]{0}', space=vmem, size = 0x1000, scoped, tag = 'output window, operand 0, single buffered']
    %9 = vsyncpa [#allocation4], 0
    %10 = vsyncpa [#allocation7], 0
    %s11 = scalar_lea.sflag [#allocation7], 1
    %12 = vsyncpa %s11, 0
    %13 = vsyncpa [#allocation5], 0
    loop: start=0, step=1, limit=4
    $region2: #{tpu_custom_call.1} parent=1 // loop_pre_header
      _
    $region3: #{tpu_custom_call.1} parent=1 // loop_header
      %s15 = sphi 0, %s19
      %p16 = scmp.ge.s32.totalorder %s15, 4
      %s22 = sphi 0, %s34
      %s23 = sphi 0, %s30
      %s24 = sphi 0, %s22
      %s25 = sphi 0, %s23
      %s26 = sphi 0, %s24
      %s27 = sphi 0, %s25
      %s37 = sphi 0, %s39
      %s40 = sphi 0, %s37
      %s41 = sphi 0, %s40
      %s57 = sphi 0, %s41
      %s63 = sphi 0, %s65
      %s66 = sphi 0, %s63
      %s67 = sphi 0, %s66
      %s83 = sphi 0, %s67
      %s87 = sphi 0, %s87
      %s89 = sphi 0, %s87
      %s90 = sphi 0, %s89
      %s104 = sphi 0, %s90
      %s108 = sphi 0, %s108
      %s110 = sphi 0, %s108
      %s111 = sphi 0, %s110
      %s125 = sphi 0, %s111
      %s131 = sphi 0, %s133
      %s134 = sphi 0, %s131
      %s135 = sphi 0, %s134
      %s151 = sphi 0, %s135
    $region4: #{tpu_custom_call.1} parent=1 // loop_header_branch
      %18 = sbr.rel (%p16) target = $region8
    $region5: #{tpu_custom_call.1} parent=1 // loop_body
      %s20 = ssub.s32 %s15, 1
      %s21 = ssub.s32 %s15, 2
      %s28 = sadd.s32 1, %s23
      %p29 = scmp.ge.s32.totalorder %s28, 2
      %s30 = scalar_select %p29, 0, %s28
      %s31 = sadd.s32 1, %s22
      %s32 = scalar_select %p29, %s31, %s22
      %p33 = scmp.ge.s32.totalorder %s32, 1
      %s34 = scalar_select %p33, 0, %s32
      %s35 = ssub.s32 %s22, %s34
      %p36 = scmp.eq.s32.totalorder %s35, 0
      %s38 = sadd.s32 %s37, 1
      %s39 = scalar_select %p36, %s37, %s38
      %p42 = pneg %p36
      %p43 = scmp.eq.s32.totalorder %s15, 1
      %p44 = por %p42, %p43
      %p45 = scmp.ne.s32.totalorder %s37, %s40
      %p46 = scmp.eq.s32.totalorder %s15, 0
      %p47 = por %p45, %p46
      %p48 = scmp.ne.s32.totalorder %s37, %s40
      %p49 = scmp.eq.s32.totalorder %s20, 1
      %p50 = por %p48, %p49
      %p51 = scmp.ne.s32.totalorder %s40, %s41
      %p52 = scmp.eq.s32.totalorder %s20, 0
      %p53 = por %p51, %p52
      %p54 = scmp.ne.s32.totalorder %s40, %s41
      %p55 = scmp.eq.s32.totalorder %s21, 1
      %p56 = por %p54, %p55
      %p58 = scmp.ne.s32.totalorder %s41, %s57
      %p59 = scmp.eq.s32.totalorder %s21, 0
      %p60 = por %p58, %p59
      %s61 = ssub.s32 %s23, %s30
      %p62 = scmp.eq.s32.totalorder %s61, 0
      %s64 = sadd.s32 %s63, 1
      %s65 = scalar_select %p62, %s63, %s64
      %p68 = pneg %p62
      %p69 = scmp.eq.s32.totalorder %s15, 1
      %p70 = por %p68, %p69
      %p71 = scmp.ne.s32.totalorder %s63, %s66
      %p72 = scmp.eq.s32.totalorder %s15, 0
      %p73 = por %p71, %p72
      %p74 = scmp.ne.s32.totalorder %s63, %s66
      %p75 = scmp.eq.s32.totalorder %s20, 1
      %p76 = por %p74, %p75
      %p77 = scmp.ne.s32.totalorder %s66, %s67
      %p78 = scmp.eq.s32.totalorder %s20, 0
      %p79 = por %p77, %p78
      %p80 = scmp.ne.s32.totalorder %s66, %s67
      %p81 = scmp.eq.s32.totalorder %s21, 1
      %p82 = por %p80, %p81
      %p84 = scmp.ne.s32.totalorder %s67, %s83
      %p85 = scmp.eq.s32.totalorder %s21, 0
      %p86 = por %p84, %p85
      %s88 = sadd.s32 %s87, 1
      %p91 = scmp.eq.s32.totalorder %s15, 1
      %p92 = scmp.ne.s32.totalorder %s87, %s89
      %p93 = scmp.eq.s32.totalorder %s15, 0
      %p94 = por %p92, %p93
      %p95 = scmp.ne.s32.totalorder %s87, %s89
      %p96 = scmp.eq.s32.totalorder %s20, 1
      %p97 = por %p95, %p96
      %p98 = scmp.ne.s32.totalorder %s89, %s90
      %p99 = scmp.eq.s32.totalorder %s20, 0
      %p100 = por %p98, %p99
      %p101 = scmp.ne.s32.totalorder %s89, %s90
      %p102 = scmp.eq.s32.totalorder %s21, 1
      %p103 = por %p101, %p102
      %p105 = scmp.ne.s32.totalorder %s90, %s104
      %p106 = scmp.eq.s32.totalorder %s21, 0
      %p107 = por %p105, %p106
      %s109 = sadd.s32 %s108, 1
      %p112 = scmp.eq.s32.totalorder %s15, 1
      %p113 = scmp.ne.s32.totalorder %s108, %s110
      %p114 = scmp.eq.s32.totalorder %s15, 0
      %p115 = por %p113, %p114
      %p116 = scmp.ne.s32.totalorder %s108, %s110
      %p117 = scmp.eq.s32.totalorder %s20, 1
      %p118 = por %p116, %p117
      %p119 = scmp.ne.s32.totalorder %s110, %s111
      %p120 = scmp.eq.s32.totalorder %s20, 0
      %p121 = por %p119, %p120
      %p122 = scmp.ne.s32.totalorder %s110, %s111
      %p123 = scmp.eq.s32.totalorder %s21, 1
      %p124 = por %p122, %p123
      %p126 = scmp.ne.s32.totalorder %s111, %s125
      %p127 = scmp.eq.s32.totalorder %s21, 0
      %p128 = por %p126, %p127
      %s129 = ssub.s32 %s22, %s34
      %p130 = scmp.eq.s32.totalorder %s129, 0
      %s132 = sadd.s32 %s131, 1
      %s133 = scalar_select %p130, %s131, %s132
      %p136 = pneg %p130
      %p137 = scmp.eq.s32.totalorder %s15, 1
      %p138 = por %p136, %p137
      %p139 = scmp.ne.s32.totalorder %s131, %s134
      %p140 = scmp.eq.s32.totalorder %s15, 0
      %p141 = por %p139, %p140
      %p142 = scmp.ne.s32.totalorder %s131, %s134
      %p143 = scmp.eq.s32.totalorder %s20, 1
      %p144 = por %p142, %p143
      %p145 = scmp.ne.s32.totalorder %s134, %s135
      %p146 = scmp.eq.s32.totalorder %s20, 0
      %p147 = por %p145, %p146
      %p148 = scmp.ne.s32.totalorder %s134, %s135
      %p149 = scmp.eq.s32.totalorder %s21, 1
      %p150 = por %p148, %p149
      %p152 = scmp.ne.s32.totalorder %s135, %s151
      %p153 = scmp.eq.s32.totalorder %s21, 0
      %p154 = por %p152, %p153
      %p155 = scmp.le.s32.totalorder 1, %s15
      %p156 = scmp.lt.s32.totalorder %s15, 3
      %p157 = pnand %p155, %p156
      %p158 = pneg %p157
      // Predicated region
      $region9: #{tpu_custom_call.1} parent=5 // pred_check
        _
      $region10: #{tpu_custom_call.1} parent=5 // pred_check_branch
        %160 = sbr.rel (%p157) target = $region12
      $region11: #{tpu_custom_call.1} parent=5 // pred_region
        %s161 = ssub.s32 %s15, 1
        // Predicated region
        $region13: #{tpu_custom_call.1} parent=11 // pred_check
          %p162 = pneg %p53
        $region14: #{tpu_custom_call.1} parent=11 // pred_check_branch
          %164 = sbr.rel (%p162) target = $region16
        $region15: #{tpu_custom_call.1} parent=11 // pred_region
          %s166 = ssub.s32 128, 128
          %167 = vsyncadd [#allocation4], %s166
          %s168 = smul.addr %s24, 128
          %s169 = scalar_lea.hbm %s0, %s168
          %s171 = sshll.u32 [#allocation3], 4
          %s172 = int_to_ptr.vmem [resolvable:$true] %s171
          %174 = dma.hbm_to_vmem [thread:$0]  %s169, 128, %s172, [#allocation4]
        $region16: #{tpu_custom_call.1} parent=11 // pred_fallthru
          _
        // Predicated region
        $region17: #{tpu_custom_call.1} parent=11 // pred_check
          %p175 = pneg %p100
        $region18: #{tpu_custom_call.1} parent=11 // pred_check_branch
          %177 = sbr.rel (%p175) target = $region20
        $region19: #{tpu_custom_call.1} parent=11 // pred_region
          %s179 = ssub.s32 1024, 1024
          %180 = vsyncadd [#allocation7], %s179
          %s181 = sshll.u32 [#allocation8], 4
          %s182 = int_to_ptr.vmem [resolvable:$true] %s181
          %187 = dma.hbm_to_vmem [thread:$0]  %s2, 1024, %s182, [#allocation7], 64, 64, 4
        $region20: #{tpu_custom_call.1} parent=11 // pred_fallthru
          _
        // Predicated region
        $region21: #{tpu_custom_call.1} parent=11 // pred_check
          %p188 = pneg %p121
        $region22: #{tpu_custom_call.1} parent=11 // pred_check_branch
          %190 = sbr.rel (%p188) target = $region24
        $region23: #{tpu_custom_call.1} parent=11 // pred_region
          _
        $region24: #{tpu_custom_call.1} parent=11 // pred_fallthru
          _
      $region12: #{tpu_custom_call.1} parent=5 // pred_fallthru
        _
      %p191 = scmp.lt.s32.totalorder %s15, 2
      // Predicated region
      $region25: #{tpu_custom_call.1} parent=5 // pred_check
        %p192 = pneg %p191
      $region26: #{tpu_custom_call.1} parent=5 // pred_check_branch
        %194 = sbr.rel (%p192) target = $region28
      $region27: #{tpu_custom_call.1} parent=5 // pred_region
        // Predicated region
        $region29: #{tpu_custom_call.1} parent=27 // pred_check
          %p195 = pneg %p73
        $region30: #{tpu_custom_call.1} parent=27 // pred_check_branch
          %197 = sbr.rel (%p195) target = $region32
        $region31: #{tpu_custom_call.1} parent=27 // pred_region
          %s198 = sand.u32 %s15, 1
          %s199 = scalar_lea.sflag [#allocation7], %s198
          %s200 = sand.u32 %s63, 1
          %s201 = smul.addr %s200, 64
          %s202 = scalar_lea.vmem [#allocation6], %s201
          %s203 = smul.u32 16, %s23
          %s205 = ssub.s32 1024, 1024
          %206 = vsyncadd %s199, %s205
          %s207 = smul.addr %s203, 64
          %s208 = scalar_lea.hbm %s1, %s207
          %s209 = sshll.u32 %s202, 4
          %s210 = int_to_ptr.vmem [resolvable:$true] %s209
          %215 = dma.hbm_to_vmem [thread:$0]  %s208, 1024, %s210, %s199, 64, 64, 4
        $region32: #{tpu_custom_call.1} parent=27 // pred_fallthru
          _
      $region28: #{tpu_custom_call.1} parent=5 // pred_fallthru
        _
      %p216 = scmp.le.s32.totalorder 1, %s15
      %p217 = scmp.lt.s32.totalorder %s15, 3
      %p218 = pnand %p216, %p217
      %p219 = pneg %p218
      // Predicated region
      $region33: #{tpu_custom_call.1} parent=5 // pred_check
        _
      $region34: #{tpu_custom_call.1} parent=5 // pred_check_branch
        %221 = sbr.rel (%p218) target = $region36
      $region35: #{tpu_custom_call.1} parent=5 // pred_region
        %s222 = ssub.s32 %s15, 1
        // Predicated region
        $region37: #{tpu_custom_call.1} parent=35 // pred_check
          %p223 = pneg %p53
        $region38: #{tpu_custom_call.1} parent=35 // pred_check_branch
          %225 = sbr.rel (%p223) target = $region40
        $region39: #{tpu_custom_call.1} parent=35 // pred_region
          %226 = dma.done [#allocation4], 128
        $region40: #{tpu_custom_call.1} parent=35 // pred_fallthru
          _
        %s227 = sand.u32 %s20, 1
        %s228 = scalar_lea.sflag [#allocation7], %s227
        %s229 = sand.u32 %s66, 1
        %s230 = smul.addr %s229, 64
        %s231 = scalar_lea.vmem [#allocation6], %s230
        // Predicated region
        $region41: #{tpu_custom_call.1} parent=35 // pred_check
          %p232 = pneg %p79
        $region42: #{tpu_custom_call.1} parent=35 // pred_check_branch
          %234 = sbr.rel (%p232) target = $region44
        $region43: #{tpu_custom_call.1} parent=35 // pred_region
          %235 = dma.done %s228, 1024
        $region44: #{tpu_custom_call.1} parent=35 // pred_fallthru
          _
        // Predicated region
        $region45: #{tpu_custom_call.1} parent=35 // pred_check
          %p236 = pneg %p100
        $region46: #{tpu_custom_call.1} parent=35 // pred_check_branch
          %238 = sbr.rel (%p236) target = $region48
        $region47: #{tpu_custom_call.1} parent=35 // pred_region
          %239 = dma.done [#allocation7], 1024
        $region48: #{tpu_custom_call.1} parent=35 // pred_fallthru
          _
        %p240 = pneg %p53
        %p241 = pneg %p50
        %s242 = sand.u32 %s20, 1
        %s243 = scalar_lea.sflag [#allocation7], %s242
        %s244 = sand.u32 %s66, 1
        %s245 = smul.addr %s244, 64
        %s246 = scalar_lea.vmem [#allocation6], %s245
        %p247 = pneg %p79
        %p248 = pneg %p76
        %p249 = pneg %p100
        %p250 = pneg %p97
        %p251 = pneg %p121
        %p252 = pneg %p118
        %p253 = pneg %p147
        %p254 = pneg %p144
        %s255 = smul.u32 16, %s25
        %p257 = scmp.eq.s32.totalorder %s25, 0
        // Predicated region
        $region49: #{tpu_custom_call.1} parent=35 // pred_check
          %p258 = pneg %p257
        $region50: #{tpu_custom_call.1} parent=35 // pred_check_branch
          %260 = sbr.rel (%p258) target = $region52
        $region51: #{tpu_custom_call.1} parent=35 // pred_region
          %261 = vst [vmem:[#allocation2] sm:$0xff] 0.0
        $region52: #{tpu_custom_call.1} parent=35 // pred_fallthru
          _
        %s262 = smul.u32 %s25, 128
        %v263 = vlaneseq
        %v264 = vshrl.u32 %v263, 7
        %v265 = vadd.s32 %v264, 8
        %v266 = vadd.s32 %v264, 16
        %v267 = vadd.s32 %v264, 24
        %v268 = vadd.s32 %v264, 32
        %v269 = vadd.s32 %v264, 40
        %v270 = vadd.s32 %v264, 48
        %v271 = vadd.s32 %v264, 56
        %v272 = vadd.s32 %v264, 64
        %v273 = vadd.s32 %v264, 72
        %v274 = vadd.s32 %v264, 80
        %v275 = vadd.s32 %v264, 88
        %v276 = vadd.s32 %v264, 96
        %v277 = vadd.s32 %v264, 104
        %v278 = vadd.s32 %v264, 112
        %v279 = vadd.s32 %v264, 120
        %v280 = vld [vmem:[#allocation3] sm:$0x1]
        %v281 = vstv %s262
        %v282 = vsub.s32 %v280, %v281
        %v283 = vlaneseq
        %v284 = vshrl.u32 %v283, 7
        %v285 = vsub.s32 0, %v284
        %v286 = vrot.slane %v282, %v285
        %vm287 = vcmp.eq.s32.totalorder %v264, %v286
        %vm288 = vcmp.eq.s32.totalorder %v265, %v286
        %vm289 = vcmp.eq.s32.totalorder %v266, %v286
        %vm290 = vcmp.eq.s32.totalorder %v267, %v286
        %vm291 = vcmp.eq.s32.totalorder %v268, %v286
        %vm292 = vcmp.eq.s32.totalorder %v269, %v286
        %vm293 = vcmp.eq.s32.totalorder %v270, %v286
        %vm294 = vcmp.eq.s32.totalorder %v271, %v286
        %vm295 = vcmp.eq.s32.totalorder %v272, %v286
        %vm296 = vcmp.eq.s32.totalorder %v273, %v286
        %vm297 = vcmp.eq.s32.totalorder %v274, %v286
        %vm298 = vcmp.eq.s32.totalorder %v275, %v286
        %vm299 = vcmp.eq.s32.totalorder %v276, %v286
        %vm300 = vcmp.eq.s32.totalorder %v277, %v286
        %vm301 = vcmp.eq.s32.totalorder %v278, %v286
        %vm302 = vcmp.eq.s32.totalorder %v279, %v286
        %v303 = vsel %vm287, 1, 0
        %v304 = vsel %vm288, 1, 0
        %v305 = vsel %vm289, 1, 0
        %v306 = vsel %vm290, 1, 0
        %v307 = vsel %vm291, 1, 0
        %v308 = vsel %vm292, 1, 0
        %v309 = vsel %vm293, 1, 0
        %v310 = vsel %vm294, 1, 0
        %v311 = vsel %vm295, 1, 0
        %v312 = vsel %vm296, 1, 0
        %v313 = vsel %vm297, 1, 0
        %v314 = vsel %vm298, 1, 0
        %v315 = vsel %vm299, 1, 0
        %v316 = vsel %vm300, 1, 0
        %v317 = vsel %vm301, 1, 0
        %v318 = vsel %vm302, 1, 0
        %v319 = vcvt.s32.f32 %v303
        %v320 = vcvt.s32.f32 %v304
        %v321 = vcvt.s32.f32 %v305
        %v322 = vcvt.s32.f32 %v306
        %v323 = vcvt.s32.f32 %v307
        %v324 = vcvt.s32.f32 %v308
        %v325 = vcvt.s32.f32 %v309
        %v326 = vcvt.s32.f32 %v310
        %v327 = vcvt.s32.f32 %v311
        %v328 = vcvt.s32.f32 %v312
        %v329 = vcvt.s32.f32 %v313
        %v330 = vcvt.s32.f32 %v314
        %v331 = vcvt.s32.f32 %v315
        %v332 = vcvt.s32.f32 %v316
        %v333 = vcvt.s32.f32 %v317
        %v334 = vcvt.s32.f32 %v318
        %v335 = vadd.f32 %v319, 0.0
        %v336 = vadd.f32 %v320, 0.0
        %v337 = vadd.f32 %v321, 0.0
        %v338 = vadd.f32 %v322, 0.0
        %v339 = vadd.f32 %v323, 0.0
        %v340 = vadd.f32 %v324, 0.0
        %v341 = vadd.f32 %v325, 0.0
        %v342 = vadd.f32 %v326, 0.0
        %v343 = vadd.f32 %v327, 0.0
        %v344 = vadd.f32 %v328, 0.0
        %v345 = vadd.f32 %v329, 0.0
        %v346 = vadd.f32 %v330, 0.0
        %v347 = vadd.f32 %v331, 0.0
        %v348 = vadd.f32 %v332, 0.0
        %v349 = vadd.f32 %v333, 0.0
        %v350 = vadd.f32 %v334, 0.0
        %v351 = vld [vmem:[#allocation3 + $0x1] sm:$0x1]
        %v352 = vsub.s32 %v351, %v281
        %v353 = vlaneseq
        %v354 = vshrl.u32 %v353, 7
        %v355 = vsub.s32 0, %v354
        %v356 = vrot.slane %v352, %v355
        %vm357 = vcmp.eq.s32.totalorder %v264, %v356
        %vm358 = vcmp.eq.s32.totalorder %v265, %v356
        %vm359 = vcmp.eq.s32.totalorder %v266, %v356
        %vm360 = vcmp.eq.s32.totalorder %v267, %v356
        %vm361 = vcmp.eq.s32.totalorder %v268, %v356
        %vm362 = vcmp.eq.s32.totalorder %v269, %v356
        %vm363 = vcmp.eq.s32.totalorder %v270, %v356
        %vm364 = vcmp.eq.s32.totalorder %v271, %v356
        %vm365 = vcmp.eq.s32.totalorder %v272, %v356
        %vm366 = vcmp.eq.s32.totalorder %v273, %v356
        %vm367 = vcmp.eq.s32.totalorder %v274, %v356
        %vm368 = vcmp.eq.s32.totalorder %v275, %v356
        %vm369 = vcmp.eq.s32.totalorder %v276, %v356
        %vm370 = vcmp.eq.s32.totalorder %v277, %v356
        %vm371 = vcmp.eq.s32.totalorder %v278, %v356
        %vm372 = vcmp.eq.s32.totalorder %v279, %v356
        %v373 = vsel %vm357, 1, 0
        %v374 = vsel %vm358, 1, 0
        %v375 = vsel %vm359, 1, 0
        %v376 = vsel %vm360, 1, 0
        %v377 = vsel %vm361, 1, 0
        %v378 = vsel %vm362, 1, 0
        %v379 = vsel %vm363, 1, 0
        %v380 = vsel %vm364, 1, 0
        %v381 = vsel %vm365, 1, 0
        %v382 = vsel %vm366, 1, 0
        %v383 = vsel %vm367, 1, 0
        %v384 = vsel %vm368, 1, 0
        %v385 = vsel %vm369, 1, 0
        %v386 = vsel %vm370, 1, 0
        %v387 = vsel %vm371, 1, 0
        %v388 = vsel %vm372, 1, 0
        %v389 = vcvt.s32.f32 %v373
        %v390 = vcvt.s32.f32 %v374
        %v391 = vcvt.s32.f32 %v375
        %v392 = vcvt.s32.f32 %v376
        %v393 = vcvt.s32.f32 %v377
        %v394 = vcvt.s32.f32 %v378
        %v395 = vcvt.s32.f32 %v379
        %v396 = vcvt.s32.f32 %v380
        %v397 = vcvt.s32.f32 %v381
        %v398 = vcvt.s32.f32 %v382
        %v399 = vcvt.s32.f32 %v383
        %v400 = vcvt.s32.f32 %v384
        %v401 = vcvt.s32.f32 %v385
        %v402 = vcvt.s32.f32 %v386
        %v403 = vcvt.s32.f32 %v387
        %v404 = vcvt.s32.f32 %v388
        %v405 = vadd.f32 %v335, %v389
        %v406 = vadd.f32 %v336, %v390
        %v407 = vadd.f32 %v337, %v391
        %v408 = vadd.f32 %v338, %v392
        %v409 = vadd.f32 %v339, %v393
        %v410 = vadd.f32 %v340, %v394
        %v411 = vadd.f32 %v341, %v395
        %v412 = vadd.f32 %v342, %v396
        %v413 = vadd.f32 %v343, %v397
        %v414 = vadd.f32 %v344, %v398
        %v415 = vadd.f32 %v345, %v399
        %v416 = vadd.f32 %v346, %v400
        %v417 = vadd.f32 %v347, %v401
        %v418 = vadd.f32 %v348, %v402
        %v419 = vadd.f32 %v349, %v403
        %v420 = vadd.f32 %v350, %v404
        %v421 = vld [vmem:[#allocation3 + $0x2] sm:$0x1]
        %v422 = vsub.s32 %v421, %v281
        %v423 = vlaneseq
        %v424 = vshrl.u32 %v423, 7
        %v425 = vsub.s32 0, %v424
        %v426 = vrot.slane %v422, %v425
        %vm427 = vcmp.eq.s32.totalorder %v264, %v426
        %vm428 = vcmp.eq.s32.totalorder %v265, %v426
        %vm429 = vcmp.eq.s32.totalorder %v266, %v426
        %vm430 = vcmp.eq.s32.totalorder %v267, %v426
        %vm431 = vcmp.eq.s32.totalorder %v268, %v426
        %vm432 = vcmp.eq.s32.totalorder %v269, %v426
        %vm433 = vcmp.eq.s32.totalorder %v270, %v426
        %vm434 = vcmp.eq.s32.totalorder %v271, %v426
        %vm435 = vcmp.eq.s32.totalorder %v272, %v426
        %vm436 = vcmp.eq.s32.totalorder %v273, %v426
        %vm437 = vcmp.eq.s32.totalorder %v274, %v426
        %vm438 = vcmp.eq.s32.totalorder %v275, %v426
        %vm439 = vcmp.eq.s32.totalorder %v276, %v426
        %vm440 = vcmp.eq.s32.totalorder %v277, %v426
        %vm441 = vcmp.eq.s32.totalorder %v278, %v426
        %vm442 = vcmp.eq.s32.totalorder %v279, %v426
        %v443 = vsel %vm427, 1, 0
        %v444 = vsel %vm428, 1, 0
        %v445 = vsel %vm429, 1, 0
        %v446 = vsel %vm430, 1, 0
        %v447 = vsel %vm431, 1, 0
        %v448 = vsel %vm432, 1, 0
        %v449 = vsel %vm433, 1, 0
        %v450 = vsel %vm434, 1, 0
        %v451 = vsel %vm435, 1, 0
        %v452 = vsel %vm436, 1, 0
        %v453 = vsel %vm437, 1, 0
        %v454 = vsel %vm438, 1, 0
        %v455 = vsel %vm439, 1, 0
        %v456 = vsel %vm440, 1, 0
        %v457 = vsel %vm441, 1, 0
        %v458 = vsel %vm442, 1, 0
        %v459 = vcvt.s32.f32 %v443
        %v460 = vcvt.s32.f32 %v444
        %v461 = vcvt.s32.f32 %v445
        %v462 = vcvt.s32.f32 %v446
        %v463 = vcvt.s32.f32 %v447
        %v464 = vcvt.s32.f32 %v448
        %v465 = vcvt.s32.f32 %v449
        %v466 = vcvt.s32.f32 %v450
        %v467 = vcvt.s32.f32 %v451
        %v468 = vcvt.s32.f32 %v452
        %v469 = vcvt.s32.f32 %v453
        %v470 = vcvt.s32.f32 %v454
        %v471 = vcvt.s32.f32 %v455
        %v472 = vcvt.s32.f32 %v456
        %v473 = vcvt.s32.f32 %v457
        %v474 = vcvt.s32.f32 %v458
        %v475 = vadd.f32 %v405, %v459
        %v476 = vadd.f32 %v406, %v460
        %v477 = vadd.f32 %v407, %v461
        %v478 = vadd.f32 %v408, %v462
        %v479 = vadd.f32 %v409, %v463
        %v480 = vadd.f32 %v410, %v464
        %v481 = vadd.f32 %v411, %v465
        %v482 = vadd.f32 %v412, %v466
        %v483 = vadd.f32 %v413, %v467
        %v484 = vadd.f32 %v414, %v468
        %v485 = vadd.f32 %v415, %v469
        %v486 = vadd.f32 %v416, %v470
        %v487 = vadd.f32 %v417, %v471
        %v488 = vadd.f32 %v418, %v472
        %v489 = vadd.f32 %v419, %v473
        %v490 = vadd.f32 %v420, %v474
        %v491 = vld [vmem:[#allocation3 + $0x3] sm:$0x1]
        %v492 = vsub.s32 %v491, %v281
        %v493 = vlaneseq
        %v494 = vshrl.u32 %v493, 7
        %v495 = vsub.s32 0, %v494
        %v496 = vrot.slane %v492, %v495
        %vm497 = vcmp.eq.s32.totalorder %v264, %v496
        %vm498 = vcmp.eq.s32.totalorder %v265, %v496
        %vm499 = vcmp.eq.s32.totalorder %v266, %v496
        %vm500 = vcmp.eq.s32.totalorder %v267, %v496
        %vm501 = vcmp.eq.s32.totalorder %v268, %v496
        %vm502 = vcmp.eq.s32.totalorder %v269, %v496
        %vm503 = vcmp.eq.s32.totalorder %v270, %v496
        %vm504 = vcmp.eq.s32.totalorder %v271, %v496
        %vm505 = vcmp.eq.s32.totalorder %v272, %v496
        %vm506 = vcmp.eq.s32.totalorder %v273, %v496
        %vm507 = vcmp.eq.s32.totalorder %v274, %v496
        %vm508 = vcmp.eq.s32.totalorder %v275, %v496
        %vm509 = vcmp.eq.s32.totalorder %v276, %v496
        %vm510 = vcmp.eq.s32.totalorder %v277, %v496
        %vm511 = vcmp.eq.s32.totalorder %v278, %v496
        %vm512 = vcmp.eq.s32.totalorder %v279, %v496
        %v513 = vsel %vm497, 1, 0
        %v514 = vsel %vm498, 1, 0
        %v515 = vsel %vm499, 1, 0
        %v516 = vsel %vm500, 1, 0
        %v517 = vsel %vm501, 1, 0
        %v518 = vsel %vm502, 1, 0
        %v519 = vsel %vm503, 1, 0
        %v520 = vsel %vm504, 1, 0
        %v521 = vsel %vm505, 1, 0
        %v522 = vsel %vm506, 1, 0
        %v523 = vsel %vm507, 1, 0
        %v524 = vsel %vm508, 1, 0
        %v525 = vsel %vm509, 1, 0
        %v526 = vsel %vm510, 1, 0
        %v527 = vsel %vm511, 1, 0
        %v528 = vsel %vm512, 1, 0
        %v529 = vcvt.s32.f32 %v513
        %v530 = vcvt.s32.f32 %v514
        %v531 = vcvt.s32.f32 %v515
        %v532 = vcvt.s32.f32 %v516
        %v533 = vcvt.s32.f32 %v517
        %v534 = vcvt.s32.f32 %v518
        %v535 = vcvt.s32.f32 %v519
        %v536 = vcvt.s32.f32 %v520
        %v537 = vcvt.s32.f32 %v521
        %v538 = vcvt.s32.f32 %v522
        %v539 = vcvt.s32.f32 %v523
        %v540 = vcvt.s32.f32 %v524
        %v541 = vcvt.s32.f32 %v525
        %v542 = vcvt.s32.f32 %v526
        %v543 = vcvt.s32.f32 %v527
        %v544 = vcvt.s32.f32 %v528
        %v545 = vadd.f32 %v475, %v529
        %v546 = vadd.f32 %v476, %v530
        %v547 = vadd.f32 %v477, %v531
        %v548 = vadd.f32 %v478, %v532
        %v549 = vadd.f32 %v479, %v533
        %v550 = vadd.f32 %v480, %v534
        %v551 = vadd.f32 %v481, %v535
        %v552 = vadd.f32 %v482, %v536
        %v553 = vadd.f32 %v483, %v537
        %v554 = vadd.f32 %v484, %v538
        %v555 = vadd.f32 %v485, %v539
        %v556 = vadd.f32 %v486, %v540
        %v557 = vadd.f32 %v487, %v541
        %v558 = vadd.f32 %v488, %v542
        %v559 = vadd.f32 %v489, %v543
        %v560 = vadd.f32 %v490, %v544
        %v561 = vld [vmem:[#allocation3 + $0x4] sm:$0x1]
        %v562 = vsub.s32 %v561, %v281
        %v563 = vlaneseq
        %v564 = vshrl.u32 %v563, 7
        %v565 = vsub.s32 0, %v564
        %v566 = vrot.slane %v562, %v565
        %vm567 = vcmp.eq.s32.totalorder %v264, %v566
        %vm568 = vcmp.eq.s32.totalorder %v265, %v566
        %vm569 = vcmp.eq.s32.totalorder %v266, %v566
        %vm570 = vcmp.eq.s32.totalorder %v267, %v566
        %vm571 = vcmp.eq.s32.totalorder %v268, %v566
        %vm572 = vcmp.eq.s32.totalorder %v269, %v566
        %vm573 = vcmp.eq.s32.totalorder %v270, %v566
        %vm574 = vcmp.eq.s32.totalorder %v271, %v566
        %vm575 = vcmp.eq.s32.totalorder %v272, %v566
        %vm576 = vcmp.eq.s32.totalorder %v273, %v566
        %vm577 = vcmp.eq.s32.totalorder %v274, %v566
        %vm578 = vcmp.eq.s32.totalorder %v275, %v566
        %vm579 = vcmp.eq.s32.totalorder %v276, %v566
        %vm580 = vcmp.eq.s32.totalorder %v277, %v566
        %vm581 = vcmp.eq.s32.totalorder %v278, %v566
        %vm582 = vcmp.eq.s32.totalorder %v279, %v566
        %v583 = vsel %vm567, 1, 0
        %v584 = vsel %vm568, 1, 0
        %v585 = vsel %vm569, 1, 0
        %v586 = vsel %vm570, 1, 0
        %v587 = vsel %vm571, 1, 0
        %v588 = vsel %vm572, 1, 0
        %v589 = vsel %vm573, 1, 0
        %v590 = vsel %vm574, 1, 0
        %v591 = vsel %vm575, 1, 0
        %v592 = vsel %vm576, 1, 0
        %v593 = vsel %vm577, 1, 0
        %v594 = vsel %vm578, 1, 0
        %v595 = vsel %vm579, 1, 0
        %v596 = vsel %vm580, 1, 0
        %v597 = vsel %vm581, 1, 0
        %v598 = vsel %vm582, 1, 0
        %v599 = vcvt.s32.f32 %v583
        %v600 = vcvt.s32.f32 %v584
        %v601 = vcvt.s32.f32 %v585
        %v602 = vcvt.s32.f32 %v586
        %v603 = vcvt.s32.f32 %v587
        %v604 = vcvt.s32.f32 %v588
        %v605 = vcvt.s32.f32 %v589
        %v606 = vcvt.s32.f32 %v590
        %v607 = vcvt.s32.f32 %v591
        %v608 = vcvt.s32.f32 %v592
        %v609 = vcvt.s32.f32 %v593
        %v610 = vcvt.s32.f32 %v594
        %v611 = vcvt.s32.f32 %v595
        %v612 = vcvt.s32.f32 %v596
        %v613 = vcvt.s32.f32 %v597
        %v614 = vcvt.s32.f32 %v598
        %v615 = vadd.f32 %v545, %v599
        %v616 = vadd.f32 %v546, %v600
        %v617 = vadd.f32 %v547, %v601
        %v618 = vadd.f32 %v548, %v602
        %v619 = vadd.f32 %v549, %v603
        %v620 = vadd.f32 %v550, %v604
        %v621 = vadd.f32 %v551, %v605
        %v622 = vadd.f32 %v552, %v606
        %v623 = vadd.f32 %v553, %v607
        %v624 = vadd.f32 %v554, %v608
        %v625 = vadd.f32 %v555, %v609
        %v626 = vadd.f32 %v556, %v610
        %v627 = vadd.f32 %v557, %v611
        %v628 = vadd.f32 %v558, %v612
        %v629 = vadd.f32 %v559, %v613
        %v630 = vadd.f32 %v560, %v614
        %v631 = vld [vmem:[#allocation3 + $0x5] sm:$0x1]
        %v632 = vsub.s32 %v631, %v281
        %v633 = vlaneseq
        %v634 = vshrl.u32 %v633, 7
        %v635 = vsub.s32 0, %v634
        %v636 = vrot.slane %v632, %v635
        %vm637 = vcmp.eq.s32.totalorder %v264, %v636
        %vm638 = vcmp.eq.s32.totalorder %v265, %v636
        %vm639 = vcmp.eq.s32.totalorder %v266, %v636
        %vm640 = vcmp.eq.s32.totalorder %v267, %v636
        %vm641 = vcmp.eq.s32.totalorder %v268, %v636
        %vm642 = vcmp.eq.s32.totalorder %v269, %v636
        %vm643 = vcmp.eq.s32.totalorder %v270, %v636
        %vm644 = vcmp.eq.s32.totalorder %v271, %v636
        %vm645 = vcmp.eq.s32.totalorder %v272, %v636
        %vm646 = vcmp.eq.s32.totalorder %v273, %v636
        %vm647 = vcmp.eq.s32.totalorder %v274, %v636
        %vm648 = vcmp.eq.s32.totalorder %v275, %v636
        %vm649 = vcmp.eq.s32.totalorder %v276, %v636
        %vm650 = vcmp.eq.s32.totalorder %v277, %v636
        %vm651 = vcmp.eq.s32.totalorder %v278, %v636
        %vm652 = vcmp.eq.s32.totalorder %v279, %v636
        %v653 = vsel %vm637, 1, 0
        %v654 = vsel %vm638, 1, 0
        %v655 = vsel %vm639, 1, 0
        %v656 = vsel %vm640, 1, 0
        %v657 = vsel %vm641, 1, 0
        %v658 = vsel %vm642, 1, 0
        %v659 = vsel %vm643, 1, 0
        %v660 = vsel %vm644, 1, 0
        %v661 = vsel %vm645, 1, 0
        %v662 = vsel %vm646, 1, 0
        %v663 = vsel %vm647, 1, 0
        %v664 = vsel %vm648, 1, 0
        %v665 = vsel %vm649, 1, 0
        %v666 = vsel %vm650, 1, 0
        %v667 = vsel %vm651, 1, 0
        %v668 = vsel %vm652, 1, 0
        %v669 = vcvt.s32.f32 %v653
        %v670 = vcvt.s32.f32 %v654
        %v671 = vcvt.s32.f32 %v655
        %v672 = vcvt.s32.f32 %v656
        %v673 = vcvt.s32.f32 %v657
        %v674 = vcvt.s32.f32 %v658
        %v675 = vcvt.s32.f32 %v659
        %v676 = vcvt.s32.f32 %v660
        %v677 = vcvt.s32.f32 %v661
        %v678 = vcvt.s32.f32 %v662
        %v679 = vcvt.s32.f32 %v663
        %v680 = vcvt.s32.f32 %v664
        %v681 = vcvt.s32.f32 %v665
        %v682 = vcvt.s32.f32 %v666
        %v683 = vcvt.s32.f32 %v667
        %v684 = vcvt.s32.f32 %v668
        %v685 = vadd.f32 %v615, %v669
        %v686 = vadd.f32 %v616, %v670
        %v687 = vadd.f32 %v617, %v671
        %v688 = vadd.f32 %v618, %v672
        %v689 = vadd.f32 %v619, %v673
        %v690 = vadd.f32 %v620, %v674
        %v691 = vadd.f32 %v621, %v675
        %v692 = vadd.f32 %v622, %v676
        %v693 = vadd.f32 %v623, %v677
        %v694 = vadd.f32 %v624, %v678
        %v695 = vadd.f32 %v625, %v679
        %v696 = vadd.f32 %v626, %v680
        %v697 = vadd.f32 %v627, %v681
        %v698 = vadd.f32 %v628, %v682
        %v699 = vadd.f32 %v629, %v683
        %v700 = vadd.f32 %v630, %v684
        %v701 = vld [vmem:[#allocation3 + $0x6] sm:$0x1]
        %v702 = vsub.s32 %v701, %v281
        %v703 = vlaneseq
        %v704 = vshrl.u32 %v703, 7
        %v705 = vsub.s32 0, %v704
        %v706 = vrot.slane %v702, %v705
        %vm707 = vcmp.eq.s32.totalorder %v264, %v706
        %vm708 = vcmp.eq.s32.totalorder %v265, %v706
        %vm709 = vcmp.eq.s32.totalorder %v266, %v706
        %vm710 = vcmp.eq.s32.totalorder %v267, %v706
        %vm711 = vcmp.eq.s32.totalorder %v268, %v706
        %vm712 = vcmp.eq.s32.totalorder %v269, %v706
        %vm713 = vcmp.eq.s32.totalorder %v270, %v706
        %vm714 = vcmp.eq.s32.totalorder %v271, %v706
        %vm715 = vcmp.eq.s32.totalorder %v272, %v706
        %vm716 = vcmp.eq.s32.totalorder %v273, %v706
        %vm717 = vcmp.eq.s32.totalorder %v274, %v706
        %vm718 = vcmp.eq.s32.totalorder %v275, %v706
        %vm719 = vcmp.eq.s32.totalorder %v276, %v706
        %vm720 = vcmp.eq.s32.totalorder %v277, %v706
        %vm721 = vcmp.eq.s32.totalorder %v278, %v706
        %vm722 = vcmp.eq.s32.totalorder %v279, %v706
        %v723 = vsel %vm707, 1, 0
        %v724 = vsel %vm708, 1, 0
        %v725 = vsel %vm709, 1, 0
        %v726 = vsel %vm710, 1, 0
        %v727 = vsel %vm711, 1, 0
        %v728 = vsel %vm712, 1, 0
        %v729 = vsel %vm713, 1, 0
        %v730 = vsel %vm714, 1, 0
        %v731 = vsel %vm715, 1, 0
        %v732 = vsel %vm716, 1, 0
        %v733 = vsel %vm717, 1, 0
        %v734 = vsel %vm718, 1, 0
        %v735 = vsel %vm719, 1, 0
        %v736 = vsel %vm720, 1, 0
        %v737 = vsel %vm721, 1, 0
        %v738 = vsel %vm722, 1, 0
        %v739 = vcvt.s32.f32 %v723
        %v740 = vcvt.s32.f32 %v724
        %v741 = vcvt.s32.f32 %v725
        %v742 = vcvt.s32.f32 %v726
        %v743 = vcvt.s32.f32 %v727
        %v744 = vcvt.s32.f32 %v728
        %v745 = vcvt.s32.f32 %v729
        %v746 = vcvt.s32.f32 %v730
        %v747 = vcvt.s32.f32 %v731
        %v748 = vcvt.s32.f32 %v732
        %v749 = vcvt.s32.f32 %v733
        %v750 = vcvt.s32.f32 %v734
        %v751 = vcvt.s32.f32 %v735
        %v752 = vcvt.s32.f32 %v736
        %v753 = vcvt.s32.f32 %v737
        %v754 = vcvt.s32.f32 %v738
        %v755 = vadd.f32 %v685, %v739
        %v756 = vadd.f32 %v686, %v740
        %v757 = vadd.f32 %v687, %v741
        %v758 = vadd.f32 %v688, %v742
        %v759 = vadd.f32 %v689, %v743
        %v760 = vadd.f32 %v690, %v744
        %v761 = vadd.f32 %v691, %v745
        %v762 = vadd.f32 %v692, %v746
        %v763 = vadd.f32 %v693, %v747
        %v764 = vadd.f32 %v694, %v748
        %v765 = vadd.f32 %v695, %v749
        %v766 = vadd.f32 %v696, %v750
        %v767 = vadd.f32 %v697, %v751
        %v768 = vadd.f32 %v698, %v752
        %v769 = vadd.f32 %v699, %v753
        %v770 = vadd.f32 %v700, %v754
        %v771 = vld [vmem:[#allocation3 + $0x7] sm:$0x1]
        %v772 = vsub.s32 %v771, %v281
        %v773 = vlaneseq
        %v774 = vshrl.u32 %v773, 7
        %v775 = vsub.s32 0, %v774
        %v776 = vrot.slane %v772, %v775
        %vm777 = vcmp.eq.s32.totalorder %v264, %v776
        %vm778 = vcmp.eq.s32.totalorder %v265, %v776
        %vm779 = vcmp.eq.s32.totalorder %v266, %v776
        %vm780 = vcmp.eq.s32.totalorder %v267, %v776
        %vm781 = vcmp.eq.s32.totalorder %v268, %v776
        %vm782 = vcmp.eq.s32.totalorder %v269, %v776
        %vm783 = vcmp.eq.s32.totalorder %v270, %v776
        %vm784 = vcmp.eq.s32.totalorder %v271, %v776
        %vm785 = vcmp.eq.s32.totalorder %v272, %v776
        %vm786 = vcmp.eq.s32.totalorder %v273, %v776
        %vm787 = vcmp.eq.s32.totalorder %v274, %v776
        %vm788 = vcmp.eq.s32.totalorder %v275, %v776
        %vm789 = vcmp.eq.s32.totalorder %v276, %v776
        %vm790 = vcmp.eq.s32.totalorder %v277, %v776
        %vm791 = vcmp.eq.s32.totalorder %v278, %v776
        %vm792 = vcmp.eq.s32.totalorder %v279, %v776
        %v793 = vsel %vm777, 1, 0
        %v794 = vsel %vm778, 1, 0
        %v795 = vsel %vm779, 1, 0
        %v796 = vsel %vm780, 1, 0
        %v797 = vsel %vm781, 1, 0
        %v798 = vsel %vm782, 1, 0
        %v799 = vsel %vm783, 1, 0
        %v800 = vsel %vm784, 1, 0
        %v801 = vsel %vm785, 1, 0
        %v802 = vsel %vm786, 1, 0
        %v803 = vsel %vm787, 1, 0
        %v804 = vsel %vm788, 1, 0
        %v805 = vsel %vm789, 1, 0
        %v806 = vsel %vm790, 1, 0
        %v807 = vsel %vm791, 1, 0
        %v808 = vsel %vm792, 1, 0
        %v809 = vcvt.s32.f32 %v793
        %v810 = vcvt.s32.f32 %v794
        %v811 = vcvt.s32.f32 %v795
        %v812 = vcvt.s32.f32 %v796
        %v813 = vcvt.s32.f32 %v797
        %v814 = vcvt.s32.f32 %v798
        %v815 = vcvt.s32.f32 %v799
        %v816 = vcvt.s32.f32 %v800
        %v817 = vcvt.s32.f32 %v801
        %v818 = vcvt.s32.f32 %v802
        %v819 = vcvt.s32.f32 %v803
        %v820 = vcvt.s32.f32 %v804
        %v821 = vcvt.s32.f32 %v805
        %v822 = vcvt.s32.f32 %v806
        %v823 = vcvt.s32.f32 %v807
        %v824 = vcvt.s32.f32 %v808
        %v825 = vadd.f32 %v755, %v809
        %v826 = vadd.f32 %v756, %v810
        %v827 = vadd.f32 %v757, %v811
        %v828 = vadd.f32 %v758, %v812
        %v829 = vadd.f32 %v759, %v813
        %v830 = vadd.f32 %v760, %v814
        %v831 = vadd.f32 %v761, %v815
        %v832 = vadd.f32 %v762, %v816
        %v833 = vadd.f32 %v763, %v817
        %v834 = vadd.f32 %v764, %v818
        %v835 = vadd.f32 %v765, %v819
        %v836 = vadd.f32 %v766, %v820
        %v837 = vadd.f32 %v767, %v821
        %v838 = vadd.f32 %v768, %v822
        %v839 = vadd.f32 %v769, %v823
        %v840 = vadd.f32 %v770, %v824
        %v841 = vpack.c.bf16 %v826, %v825
        %v842 = vpack.c.bf16 %v828, %v827
        %v843 = vpack.c.bf16 %v830, %v829
        %v844 = vpack.c.bf16 %v832, %v831
        %v845 = vpack.c.bf16 %v834, %v833
        %v846 = vpack.c.bf16 %v836, %v835
        %v847 = vpack.c.bf16 %v838, %v837
        %v848 = vpack.c.bf16 %v840, %v839
        %v849 = vld [vmem:[%s231] sm:$0xf]
        %v850 = vld [vmem:[%s231 + $0x4] sm:$0xf]
        %v851 = vld [vmem:[%s231 + $0x8] sm:$0xf]
        %v852 = vld [vmem:[%s231 + $0xc] sm:$0xf]
        %v853 = vld [vmem:[%s231 + $0x10] sm:$0xf]
        %v854 = vld [vmem:[%s231 + $0x14] sm:$0xf]
        %v855 = vld [vmem:[%s231 + $0x18] sm:$0xf]
        %v856 = vld [vmem:[%s231 + $0x1c] sm:$0xf]
        %v857 = vld [vmem:[%s231 + $0x20] sm:$0xf]
        %v858 = vld [vmem:[%s231 + $0x24] sm:$0xf]
        %v859 = vld [vmem:[%s231 + $0x28] sm:$0xf]
        %v860 = vld [vmem:[%s231 + $0x2c] sm:$0xf]
        %v861 = vld [vmem:[%s231 + $0x30] sm:$0xf]
        %v862 = vld [vmem:[%s231 + $0x34] sm:$0xf]
        %v863 = vld [vmem:[%s231 + $0x38] sm:$0xf]
        %v864 = vld [vmem:[%s231 + $0x3c] sm:$0xf]
        %v865 = vld [vmem:[#allocation2] sm:$0xff]
        %866 = vxpose.xlu0.c.b16.start [1/8] %v841, 128
        %867 = vxpose.xlu0.c.b16.cont [2/8] %v842, 128
        %868 = vxpose.xlu0.c.b16.cont [3/8] %v843, 128
        %869 = vxpose.xlu0.c.b16.cont [4/8] %v844, 128
        %870 = vxpose.xlu0.c.b16.cont [5/8] %v845, 128
        %871 = vxpose.xlu0.c.b16.cont [6/8] %v846, 128
        %872 = vxpose.xlu0.c.b16.cont [7/8] %v847, 128
        %873 = vxpose.xlu0.c.b16.end [8/8] %v848, 128
        %v874 = vpop.trf.xlu0
        %v875 = vpop.trf.xlu0
        %v876 = vpop.trf.xlu0
        %v877 = vpop.trf.xlu0
        %v878 = vpop.trf.xlu0
        %v879 = vpop.trf.xlu0
        %v880 = vpop.trf.xlu0
        %v881 = vpop.trf.xlu0
        %v898 = vunpack.c.l.b16 %v849
        %v899 = vunpack.c.l.b16 %v850
        %v900 = vunpack.c.l.b16 %v851
        %v901 = vunpack.c.l.b16 %v852
        %v902 = vunpack.c.l.b16 %v853
        %v903 = vunpack.c.l.b16 %v854
        %v904 = vunpack.c.l.b16 %v855
        %v905 = vunpack.c.l.b16 %v856
        %v906 = vunpack.c.l.b16 %v857
        %v907 = vunpack.c.l.b16 %v858
        %v908 = vunpack.c.l.b16 %v859
        %v909 = vunpack.c.l.b16 %v860
        %v910 = vunpack.c.l.b16 %v861
        %v911 = vunpack.c.l.b16 %v862
        %v912 = vunpack.c.l.b16 %v863
        %v913 = vunpack.c.l.b16 %v864
        %v914 = vpack.c.b16 %v899, %v898
        %v915 = vpack.c.b16 %v901, %v900
        %v916 = vpack.c.b16 %v903, %v902
        %v917 = vpack.c.b16 %v905, %v904
        %v918 = vpack.c.b16 %v907, %v906
        %v919 = vpack.c.b16 %v909, %v908
        %v920 = vpack.c.b16 %v911, %v910
        %v921 = vpack.c.b16 %v913, %v912
        %930 = vmatprep.subr.bf16.mxu0 0
        %931 = vmatpush1.bf16.msra.mxu0 %v914
        %932 = vmatprep.subr.bf16.mxu0 0
        %933 = vmatpush1.bf16.msra.mxu0 %v915
        %934 = vmatprep.subr.bf16.mxu0 0
        %935 = vmatpush1.bf16.msra.mxu0 %v916
        %936 = vmatprep.subr.bf16.mxu0 0
        %937 = vmatpush1.bf16.msra.mxu0 %v917
        %938 = vmatprep.subr.bf16.mxu0 0
        %939 = vmatpush1.bf16.msra.mxu0 %v918
        %940 = vmatprep.subr.bf16.mxu0 0
        %941 = vmatpush1.bf16.msra.mxu0 %v919
        %942 = vmatprep.subr.bf16.mxu0 0
        %943 = vmatpush1.bf16.msra.mxu0 %v920
        %944 = vmatprep.subr.bf16.mxu0 0
        %945 = vmatpush1.bf16.msra.mxu0 %v921
        %946 = vmatprep.subr.bf16.mxu0 0
        %947 = vmatpush1.bf16.msra.mxu0 0
        %948 = vmatprep.subr.bf16.mxu0 0
        %949 = vmatpush1.bf16.msra.mxu0 0
        %950 = vmatprep.subr.bf16.mxu0 0
        %951 = vmatpush1.bf16.msra.mxu0 0
        %952 = vmatprep.subr.bf16.mxu0 0
        %953 = vmatpush1.bf16.msra.mxu0 0
        %954 = vmatprep.subr.bf16.mxu0 0
        %955 = vmatpush1.bf16.msra.mxu0 0
        %956 = vmatprep.subr.bf16.mxu0 0
        %957 = vmatpush1.bf16.msra.mxu0 0
        %958 = vmatprep.subr.bf16.mxu0 0
        %959 = vmatpush1.bf16.msra.mxu0 0
        %960 = vmatprep.subr.bf16.mxu0 0
        %961 = vmatpush1.bf16.msra.mxu0 0
        %962 = vmatprep.mubr.bf16.mxu0 0
        %963 = vmatmul.mubr.bf16.gmra.mrb[0].mxu0 %v874
        %v964 = vpop.f32.mrb[0].mxu0
        %v965 = vadd.f32 0.0, %v964
        %v966 = vpop.f32.mrb[0].mxu0
        %v967 = vpop.f32.mrb[0].mxu0
        %v968 = vpop.f32.mrb[0].mxu0
        %969 = vdwg.mxu0
        %v970 = vadd.f32 %v865, %v965
        %971 = vst [vmem:[#allocation2] sm:$0xff] %v970
        %p972 = scmp.eq.s32.totalorder %s25, 1
        // Predicated region
        $region53: #{tpu_custom_call.1} parent=35 // pred_check
          %p973 = pneg %p972
        $region54: #{tpu_custom_call.1} parent=35 // pred_check_branch
          %975 = sbr.rel (%p973) target = $region56
        $region55: #{tpu_custom_call.1} parent=35 // pred_region
          %v976 = vld [vmem:[#allocation2] sm:$0xff]
          %v977 = vpack.c.bf16 %v976, %v976
          %v978 = vld [vmem:[#allocation8] sm:$0xf]
          %v979 = vld [vmem:[#allocation8 + $0x4] sm:$0xf]
          %v980 = vld [vmem:[#allocation8 + $0x8] sm:$0xf]
          %v981 = vld [vmem:[#allocation8 + $0xc] sm:$0xf]
          %v982 = vld [vmem:[#allocation8 + $0x10] sm:$0xf]
          %v983 = vld [vmem:[#allocation8 + $0x14] sm:$0xf]
          %v984 = vld [vmem:[#allocation8 + $0x18] sm:$0xf]
          %v985 = vld [vmem:[#allocation8 + $0x1c] sm:$0xf]
          %v986 = vld [vmem:[#allocation8 + $0x20] sm:$0xf]
          %v987 = vld [vmem:[#allocation8 + $0x24] sm:$0xf]
          %v988 = vld [vmem:[#allocation8 + $0x28] sm:$0xf]
          %v989 = vld [vmem:[#allocation8 + $0x2c] sm:$0xf]
          %v990 = vld [vmem:[#allocation8 + $0x30] sm:$0xf]
          %v991 = vld [vmem:[#allocation8 + $0x34] sm:$0xf]
          %v992 = vld [vmem:[#allocation8 + $0x38] sm:$0xf]
          %v993 = vld [vmem:[#allocation8 + $0x3c] sm:$0xf]
          %v994 = vld [vmem:[%s3] sm:$0x1]
          %v996 = vlaneseq
          %v997 = vshrl.u32 %v996, 7
          %v998 = vsub.s32 0, %v997
          %v999 = vrot.slane %v994, %v998
          %v1017 = vunpack.c.l.b16 %v978
          %v1018 = vunpack.c.l.b16 %v979
          %v1019 = vunpack.c.l.b16 %v980
          %v1020 = vunpack.c.l.b16 %v981
          %v1021 = vunpack.c.l.b16 %v982
          %v1022 = vunpack.c.l.b16 %v983
          %v1023 = vunpack.c.l.b16 %v984
          %v1024 = vunpack.c.l.b16 %v985
          %v1025 = vunpack.c.l.b16 %v986
          %v1026 = vunpack.c.l.b16 %v987
          %v1027 = vunpack.c.l.b16 %v988
          %v1028 = vunpack.c.l.b16 %v989
          %v1029 = vunpack.c.l.b16 %v990
          %v1030 = vunpack.c.l.b16 %v991
          %v1031 = vunpack.c.l.b16 %v992
          %v1032 = vunpack.c.l.b16 %v993
          %v1033 = vpack.c.b16 %v1018, %v1017
          %v1034 = vpack.c.b16 %v1020, %v1019
          %v1035 = vpack.c.b16 %v1022, %v1021
          %v1036 = vpack.c.b16 %v1024, %v1023
          %v1037 = vpack.c.b16 %v1026, %v1025
          %v1038 = vpack.c.b16 %v1028, %v1027
          %v1039 = vpack.c.b16 %v1030, %v1029
          %v1040 = vpack.c.b16 %v1032, %v1031
          %1049 = vmatprep.subr.bf16.mxu0 0
          %1050 = vmatpush1.bf16.msra.mxu0 %v1033
          %1051 = vmatprep.subr.bf16.mxu0 0
          %1052 = vmatpush1.bf16.msra.mxu0 %v1034
          %1053 = vmatprep.subr.bf16.mxu0 0
          %1054 = vmatpush1.bf16.msra.mxu0 %v1035
          %1055 = vmatprep.subr.bf16.mxu0 0
          %1056 = vmatpush1.bf16.msra.mxu0 %v1036
          %1057 = vmatprep.subr.bf16.mxu0 0
          %1058 = vmatpush1.bf16.msra.mxu0 %v1037
          %1059 = vmatprep.subr.bf16.mxu0 0
          %1060 = vmatpush1.bf16.msra.mxu0 %v1038
          %1061 = vmatprep.subr.bf16.mxu0 0
          %1062 = vmatpush1.bf16.msra.mxu0 %v1039
          %1063 = vmatprep.subr.bf16.mxu0 0
          %1064 = vmatpush1.bf16.msra.mxu0 %v1040
          %1065 = vmatprep.subr.bf16.mxu0 0
          %1066 = vmatpush1.bf16.msra.mxu0 0
          %1067 = vmatprep.subr.bf16.mxu0 0
          %1068 = vmatpush1.bf16.msra.mxu0 0
          %1069 = vmatprep.subr.bf16.mxu0 0
          %1070 = vmatpush1.bf16.msra.mxu0 0
          %1071 = vmatprep.subr.bf16.mxu0 0
          %1072 = vmatpush1.bf16.msra.mxu0 0
          %1073 = vmatprep.subr.bf16.mxu0 0
          %1074 = vmatpush1.bf16.msra.mxu0 0
          %1075 = vmatprep.subr.bf16.mxu0 0
          %1076 = vmatpush1.bf16.msra.mxu0 0
          %1077 = vmatprep.subr.bf16.mxu0 0
          %1078 = vmatpush1.bf16.msra.mxu0 0
          %1079 = vmatprep.subr.bf16.mxu0 0
          %1080 = vmatpush1.bf16.msra.mxu0 0
          %1081 = vmatprep.mubr.bf16.mxu0 0
          %1082 = vmatmul.mubr.bf16.gmra.mrb[0].mxu0 %v977
          %v1083 = vpop.f32.mrb[0].mxu0
          %v1084 = vadd.f32 %v999, %v1083
          %v1085 = vpop.f32.mrb[0].mxu0
          %v1086 = vpop.f32.mrb[0].mxu0
          %v1087 = vpop.f32.mrb[0].mxu0
          %1088 = vdwg.mxu0
          %1089 = vst [vmem:[#allocation9] sm:$0xff] %v1084
        $region56: #{tpu_custom_call.1} parent=35 // pred_fallthru
          _
        // Predicated region
        $region57: #{tpu_custom_call.1} parent=35 // pred_check
          %p1090 = pneg %p144
        $region58: #{tpu_custom_call.1} parent=35 // pred_check_branch
          %1092 = sbr.rel (%p1090) target = $region60
        $region59: #{tpu_custom_call.1} parent=35 // pred_region
          %s1094 = ssub.s32 128, 128
          %1095 = vsyncadd [#allocation5], %s1094
          %s1096 = smul.addr %s24, 128
          %s1097 = scalar_lea.hbm %s4, %s1096
          %s1099 = sshll.u32 [#allocation9], 4
          %s1100 = int_to_ptr.vmem [resolvable:$true] %s1099
          %1102 = dma.vmem_to_hbm [thread:$0]  %s1100, 128, %s1097, [#allocation5]
        $region60: #{tpu_custom_call.1} parent=35 // pred_fallthru
          _
        // Predicated region
        $region61: #{tpu_custom_call.1} parent=35 // pred_check
          %p1103 = pneg %p144
        $region62: #{tpu_custom_call.1} parent=35 // pred_check_branch
          %1105 = sbr.rel (%p1103) target = $region64
        $region63: #{tpu_custom_call.1} parent=35 // pred_region
          %1106 = dma.done [#allocation5], 128
        $region64: #{tpu_custom_call.1} parent=35 // pred_fallthru
          _
      $region36: #{tpu_custom_call.1} parent=5 // pred_fallthru
        _
      %p1107 = scmp.le.s32.totalorder 2, %s15
      // Predicated region
      $region65: #{tpu_custom_call.1} parent=5 // pred_check
        %p1108 = pneg %p1107
      $region66: #{tpu_custom_call.1} parent=5 // pred_check_branch
        %1110 = sbr.rel (%p1108) target = $region68
      $region67: #{tpu_custom_call.1} parent=5 // pred_region
        %s1111 = ssub.s32 %s15, 2
      $region68: #{tpu_custom_call.1} parent=5 // pred_fallthru
        _
    $region6: #{tpu_custom_call.1} parent=1 // loop_footer
      %s19 = sadd.s32 1, %s15
    $region7: #{tpu_custom_call.1} parent=1 // loop_footer_branch
      %14 = sbr.rel target = $region3
    $region8: #{tpu_custom_call.1} parent=1 // loop_exit
      _
    %1112 = vsyncpa [#allocation4], 1
    %s1113 = scalar_lea.sflag [#allocation4], 1
    %1114 = vsyncpa %s1113, 1
    %1115 = vsyncpa [#allocation7], 1
    %s1116 = scalar_lea.sflag [#allocation7], 1
    %1117 = vsyncpa %s1116, 1
    %1118 = vsyncpa [#allocation5], 1
    %s1119 = scalar_lea.sflag [#allocation5], 1
    %1120 = vsyncpa %s1119, 1

</llo_original>
